<compile_context>
chip_gen: v7x
topology: tpu7x:2x2x1
jax: 0.10.0
libtpu: 0.0.40
codegen_flags: <defaults>
</compile_context>

<pallas_src>
import jax
import jax.numpy as jnp
from jax import lax
from jax.experimental import pallas as pl
from jax.experimental.pallas import tpu as pltpu


_VC = 128  # vocab lane-chunk for the counts construction (one MXU K-pass)


def _round_up(x: int, m: int) -> int:
    return (x + m - 1) // m * m


def _pick_batch_tile(batch: int, batch_tile: int) -> int:
    """ids are laid out [S, B] in the kernel, so the batch is a LANE axis there:
    a multi-tile TB must be a multiple of 128, while one full-extent tile of any
    8-aligned size is also legal."""
    b8 = _round_up(batch, 8)
    if b8 <= batch_tile and b8 % 128 != 0:
        return b8                                   # single full-extent batch tile
    tb = min(_round_up(batch_tile, 128), _round_up(b8, 128))
    # v7x megacore: avoid a single >=256-row tile so the "parallel" batch axis
    # actually shards across both TensorCores.
    if _round_up(b8, tb) // tb < 2 and tb >= 256:
        tb //= 2
    return tb


def nbow_kernel(idsT_ref, emb_ref, wt_ref, b_ref, out_ref, acc_ref):
    v_idx = pl.program_id(1)
    S, TB = idsT_ref.shape                          # ids tile, transposed: [S, TB]
    TV = emb_ref.shape[0]
    n_chunks = TV // _VC
    v_base = v_idx * TV

    @pl.when(v_idx == 0)
    def _():
        acc_ref[...] = jnp.zeros_like(acc_ref)

    # Occupancy check: skip the whole counts+matmul body if no token of this batch
    # tile falls inside this vocab tile (cost: ~S*TB compares, negligible).
    ids_all = idsT_ref[...]
    in_range = (ids_all >= v_base) & (ids_all < v_base + TV)
    hit = jnp.max(in_range.astype(jnp.int32)) > 0

    @pl.when(hit)
    def _():
        # Chunk the one-hot counts over the vocab (lane) axis: the live counts
        # tensor is only [_VC, TB] f32 (+ one iota of the same size), so the
        # S-loop never spills; each chunk is immediately contracted on the MXU.
        for c in range(n_chunks):
            base = v_base + c * _VC
            iota_c = lax.broadcasted_iota(jnp.int32, (_VC, TB), 0) + base

            def step(s, cnt):
                row = idsT_ref[pl.ds(s, 1), :]                 # [1, TB] sublane slice
                return cnt + (row == iota_c).astype(jnp.float32)

            cnt = jnp.zeros((_VC, TB), jnp.float32)
            if S <= 16:                       # small static S: full unroll is fine
                for s in range(S):
                    cnt = step(s, cnt)
            else:                             # realistic S: bounded-unroll fori_loop
                cnt = lax.fori_loop(0, S, step, cnt, unroll=8)

            # counts^T [VC, TB] (x) emb_chunk [VC, D] -> [TB, D], f32 accumulation.
            acc_ref[...] += lax.dot_general(
                cnt.astype(emb_ref.dtype), emb_ref[pl.ds(c * _VC, _VC), :],
                dimension_numbers=(((0,), (0,)), ((), ())),
                preferred_element_type=jnp.float32)

    @pl.when(v_idx == pl.num_programs(1) - 1)
    def _():
        pooled = acc_ref[...] * (1.0 / S)            # mean over sequence (torch.mean(dim=1))
        # fc epilogue: plain [TB, D] @ [D, O_pad] dot against the pre-transposed,
        # lane-dense weight slab; bias added in f32.
        pred = jnp.dot(pooled.astype(wt_ref.dtype), wt_ref[...],
                       preferred_element_type=jnp.float32)
        out_ref[...] = (pred + b_ref[...]).astype(out_ref.dtype)


def nbow_forward(ids, embedding, fc_weight, fc_bias, *,
                 batch_tile: int = 128, vocab_tile: int = 1024, mxu_dtype=None):
    """ids: [B,S] int; embedding: [V,D]; fc_weight: [O,D]; fc_bias: [O] -> [B,O] f32.

    mxu_dtype=jnp.bfloat16 casts the MXU operands (embedding table, fc weight) only;
    counts accumulation stays f32 (exact; also v5e has no bf16 VALU).
    """
    B, S = ids.shape
    V, D = embedding.shape
    O, D2 = fc_weight.shape
    assert D2 == D

    if mxu_dtype is not None:
        embedding = embedding.astype(mxu_dtype)
        fc_weight = fc_weight.astype(mxu_dtype)

    TB = _pick_batch_tile(B, batch_tile)
    B_pad = _round_up(B, TB)
    TV = min(_round_up(vocab_tile, _VC), _round_up(V, _VC))
    V_pad = _round_up(V, TV)
    O_pad = _round_up(O, 128)                        # lane-dense output slab

    idsT_p = jnp.pad(ids.astype(jnp.int32).T, ((0, 0), (0, B_pad - B)))   # [S, B_pad]
    emb_p = jnp.pad(embedding, ((0, V_pad - V), (0, 0)))                  # [V_pad, D]
    wt_p = jnp.pad(fc_weight.T, ((0, 0), (0, O_pad - O)))                 # [D, O_pad]
    b_p = jnp.pad(fc_bias.astype(jnp.float32), (0, O_pad - O))[None, :]   # [1, O_pad]

    grid = (B_pad // TB, V_pad // TV)                # (parallel batch, vocab reduction)

    # VMEM budget derived from the (padded, double-buffered) footprint + headroom,
    # instead of a blanket 48 MiB (keeps headroom on v7x's 64 MiB/TC).
    emb_it = emb_p.dtype.itemsize
    wt_it = wt_p.dtype.itemsize
    vmem_need = (
        2 * _round_up(S, 8) * _round_up(TB, 128) * 4     # ids tile (double-buffered)
        + 2 * TV * _round_up(D, 128) * emb_it            # streamed embedding tile
        + 2 * _round_up(D, 8) * O_pad * wt_it            # fc weight (constant block)
        + 2 * 8 * O_pad * 4                              # fc bias
        + 2 * _round_up(TB, 8) * O_pad * 4               # output tile
        + _round_up(TB, 8) * _round_up(D, 128) * 4)      # f32 pooled-sum accumulator
    vmem_limit = max(8 << 20, min(int(1.5 * vmem_need) + (2 << 20), 100 << 20))

    out = pl.pallas_call(
        nbow_kernel,
        out_shape=jax.ShapeDtypeStruct((B_pad, O_pad), jnp.float32),
        grid_spec=pltpu.PrefetchScalarGridSpec(
            num_scalar_prefetch=0,
            grid=grid,
            in_specs=[
                pl.BlockSpec((S, TB), lambda i, v: (0, i)),      # ids (transposed)
                pl.BlockSpec((TV, D), lambda i, v: (v, 0)),      # streamed emb tile
                pl.BlockSpec((D, O_pad), lambda i, v: (0, 0)),   # fc weight^T (lane-dense)
                pl.BlockSpec((1, O_pad), lambda i, v: (0, 0)),   # fc bias
            ],
            out_specs=pl.BlockSpec((TB, O_pad), lambda i, v: (i, 0)),
            scratch_shapes=[pltpu.VMEM((TB, D), jnp.float32)],
        ),
        compiler_params=pltpu.CompilerParams(
            dimension_semantics=("parallel", "arbitrary"),
            vmem_limit_bytes=vmem_limit,
        ),
    )(idsT_p, emb_p, wt_p, b_p)

    return out[:B, :O]


if __name__ == "__main__":
    def torch_like_init(key, vocab_size, embedding_dim, output_dim, pad_index):
        k_emb, k_w, k_b = jax.random.split(key, 3)
        # nn.Embedding: N(0,1) init, padding_idx row forced to zero.
        emb = jax.random.normal(k_emb, (vocab_size, embedding_dim), jnp.float32)
        emb = emb.at[pad_index].set(0.0)
        # nn.Linear: U(-1/sqrt(in), 1/sqrt(in)) for weight and bias.
        bound = 1.0 / (embedding_dim ** 0.5)
        w = jax.random.uniform(k_w, (output_dim, embedding_dim), jnp.float32,
                               minval=-bound, maxval=bound)
        b = jax.random.uniform(k_b, (output_dim,), jnp.float32,
                               minval=-bound, maxval=bound)
        return emb, w, b

    def reference(ids, emb, w, b):
        # Pure-JAX reference of the PyTorch forward (embed -> mean(dim=1) -> fc).
        # Like torch.mean(dim=1), pad tokens are included in the denominator.
        return jnp.take(emb, ids, axis=0).mean(axis=1) @ w.T + b

    key = jax.random.PRNGKey(0)
    k1, k2, k_ids1, k_ids2 = jax.random.split(key, 4)

    # --- Config 1: small demo shapes (single vocab tile, fully unrolled seq loop). ---
    vocab, dim, out_dim, pad_index, batch, seq = 128, 128, 8, 0, 4, 8
    emb, w, b = torch_like_init(k1, vocab, dim, out_dim, pad_index)
    ids = jax.random.randint(k_ids1, (batch, seq), 0, vocab, dtype=jnp.int32)
    ids = ids.at[:, -2:].set(pad_index)              # include some padding tokens

    got = jax.block_until_ready(nbow_forward(ids, emb, w, b))
    ref = reference(ids, emb, w, b)
    assert got.shape == (batch, out_dim)
    assert jnp.allclose(got, ref, atol=1e-4, rtol=1e-4), "f32 mismatch (config 1)"

    # bf16 MXU operands: same data, looser tolerance (operands rounded to bf16).
    got_bf16 = jax.block_until_ready(
        nbow_forward(ids, emb, w, b, mxu_dtype=jnp.bfloat16))
    assert jnp.allclose(got_bf16, ref, atol=3e-2, rtol=3e-2), "bf16 mismatch"

    # --- Config 2: multi batch/vocab tiles, multiple vocab chunks, fori seq loop. ---
    vocab2, dim2, out2, batch2, seq2 = 512, 128, 10, 160, 24
    emb2, w2, b2 = torch_like_init(k2, vocab2, dim2, out2, pad_index)
    ids2 = jax.random.randint(k_ids2, (batch2, seq2), 0, vocab2, dtype=jnp.int32)

    got2 = jax.block_until_ready(nbow_forward(ids2, emb2, w2, b2, vocab_tile=256))
    ref2 = reference(ids2, emb2, w2, b2)
    assert got2.shape == (batch2, out2)
    assert jnp.allclose(got2, ref2, atol=1e-4, rtol=1e-4), "f32 mismatch (config 2)"

    print("KERNEL_OK")
</pallas_src>

<mosaic_0001>
module attributes {stable_mosaic.version = 11 : i64} {
  func.func @nbow_kernel(%arg0: i32, %arg1: i32, %arg2: memref<8x8xi32, #tpu.memory_space<vmem>>, %arg3: memref<128x128xf32, #tpu.memory_space<vmem>>, %arg4: memref<128x128xf32, #tpu.memory_space<vmem>>, %arg5: memref<1x128xf32, #tpu.memory_space<vmem>>, %arg6: memref<8x128xf32, #tpu.memory_space<vmem>>, %arg7: memref<8x128xf32, #tpu.memory_space<vmem>>) attributes {dimension_semantics = [#tpu.dimension_semantics<parallel>, #tpu.dimension_semantics<arbitrary>], iteration_bounds = array<i64: 1, 1>, scalar_prefetch = 0 : i64, scratch_operands = 1 : i64, tpu.core_type = #tpu.core_type<tc>, window_params = [{transform_indices = @transform_0, window_bounds = array<i64: 8, 8>}, {transform_indices = @transform_1, window_bounds = array<i64: 128, 128>}, {pipeline_mode = #tpu.pipeline_mode<synchronous>, transform_indices = @transform_2, window_bounds = array<i64: 128, 128>}, {pipeline_mode = #tpu.pipeline_mode<synchronous>, transform_indices = @transform_3, window_bounds = array<i64: 1, 128>}, {transform_indices = @transform_4, window_bounds = array<i64: 8, 128>}]} {
    %c128_i32 = arith.constant 128 : i32
    %0 = arith.muli %arg1, %c128_i32 : i32
    %c0_i32 = arith.constant 0 : i32
    %1 = arith.cmpi eq, %arg1, %c0_i32 : i32
    %2 = arith.extui %1 : i1 to i32
    %c0_i32_0 = arith.constant 0 : i32
    %3 = arith.cmpi ne, %2, %c0_i32_0 : i32
    scf.if %3 {
      %cst_7 = arith.constant 0.000000e+00 : f32
      %22 = vector.broadcast %cst_7 : f32 to vector<8x128xf32>
      %c0_8 = arith.constant 0 : index
      %c0_9 = arith.constant 0 : index
      %23 = vector.load %arg7[%c0_8, %c0_9] : memref<8x128xf32, #tpu.memory_space<vmem>>, vector<8x128xf32>
      tpu.vector_store %arg7[%c0_8, %c0_9], %22 {strides = array<i32>} : memref<8x128xf32, #tpu.memory_space<vmem>>, vector<8x128xf32>,
    } else {
    }
    %c0 = arith.constant 0 : index
    %c0_1 = arith.constant 0 : index
    %4 = vector.load %arg2[%c0, %c0_1] : memref<8x8xi32, #tpu.memory_space<vmem>>, vector<8x8xi32>
    %5 = vector.broadcast %0 : i32 to vector<8x8xi32>
    %6 = arith.cmpi sge, %4, %5 : vector<8x8xi32>
    %c128_i32_2 = arith.constant 128 : i32
    %7 = arith.addi %0, %c128_i32_2 : i32
    %8 = vector.broadcast %7 : i32 to vector<8x8xi32>
    %9 = arith.cmpi slt, %4, %8 : vector<8x8xi32>
    %10 = arith.andi %6, %9 : vector<8x8xi1>
    %11 = arith.extui %10 : vector<8x8xi1> to vector<8x8xi32>
    %12 = vector.shape_cast %11 : vector<8x8xi32> to vector<1x8x8xi32>
    %cst = arith.constant dense<-2147483648> : vector<1xi32>
    %13 = vector.multi_reduction <maxsi>, %12, %cst [1, 2] : vector<1x8x8xi32> to vector<1xi32>
    %14 = vector.shape_cast %13 : vector<1xi32> to vector<1x1x1xi32>
    %15 = vector.extract %14[0, 0, 0] : i32 from vector<1x1x1xi32>
    %c0_i32_3 = arith.constant 0 : i32
    %16 = arith.cmpi sgt, %15, %c0_i32_3 : i32
    %17 = arith.extui %16 : i1 to i32
    %c0_i32_4 = arith.constant 0 : i32
    %18 = arith.cmpi ne, %17, %c0_i32_4 : i32
    scf.if %18 {
      %c0_i32_7 = arith.constant 0 : i32
      %22 = arith.addi %0, %c0_i32_7 : i32
      %23 = tpu.iota {dimensions = array<i32: 0>} : vector<128x8xi32>
      %24 = vector.broadcast %22 : i32 to vector<128x8xi32>
      %25 = arith.addi %23, %24 : vector<128x8xi32>
      %cst_8 = arith.constant 0.000000e+00 : f32
      %26 = vector.broadcast %cst_8 : f32 to vector<128x8xf32>
      %c0_9 = arith.constant 0 : index
      %c0_10 = arith.constant 0 : index
      %27 = vector.load %arg2[%c0_9, %c0_10] : memref<8x8xi32, #tpu.memory_space<vmem>>, vector<1x8xi32>
      %28 = vector.broadcast %27 : vector<1x8xi32> to vector<128x8xi32>
      %29 = arith.cmpi eq, %28, %25 : vector<128x8xi32>
      %30 = arith.extui %29 : vector<128x8xi1> to vector<128x8xi32>
      %31 = arith.sitofp %30 : vector<128x8xi32> to vector<128x8xf32>
      %32 = arith.addf %26, %31 : vector<128x8xf32>
      %c1 = arith.constant 1 : index
      %c0_11 = arith.constant 0 : index
      %33 = vector.load %arg2[%c1, %c0_11] : memref<8x8xi32, #tpu.memory_space<vmem>>, vector<1x8xi32>
      %34 = vector.broadcast %33 : vector<1x8xi32> to vector<128x8xi32>
      %35 = arith.cmpi eq, %34, %25 : vector<128x8xi32>
      %36 = arith.extui %35 : vector<128x8xi1> to vector<128x8xi32>
      %37 = arith.sitofp %36 : vector<128x8xi32> to vector<128x8xf32>
      %38 = arith.addf %32, %37 : vector<128x8xf32>
      %c2 = arith.constant 2 : index
      %c0_12 = arith.constant 0 : index
      %39 = vector.load %arg2[%c2, %c0_12] : memref<8x8xi32, #tpu.memory_space<vmem>>, vector<1x8xi32>
      %40 = vector.broadcast %39 : vector<1x8xi32> to vector<128x8xi32>
      %41 = arith.cmpi eq, %40, %25 : vector<128x8xi32>
      %42 = arith.extui %41 : vector<128x8xi1> to vector<128x8xi32>
      %43 = arith.sitofp %42 : vector<128x8xi32> to vector<128x8xf32>
      %44 = arith.addf %38, %43 : vector<128x8xf32>
      %c3 = arith.constant 3 : index
      %c0_13 = arith.constant 0 : index
      %45 = vector.load %arg2[%c3, %c0_13] : memref<8x8xi32, #tpu.memory_space<vmem>>, vector<1x8xi32>
      %46 = vector.broadcast %45 : vector<1x8xi32> to vector<128x8xi32>
      %47 = arith.cmpi eq, %46, %25 : vector<128x8xi32>
      %48 = arith.extui %47 : vector<128x8xi1> to vector<128x8xi32>
      %49 = arith.sitofp %48 : vector<128x8xi32> to vector<128x8xf32>
      %50 = arith.addf %44, %49 : vector<128x8xf32>
      %c4 = arith.constant 4 : index
      %c0_14 = arith.constant 0 : index
      %51 = vector.load %arg2[%c4, %c0_14] : memref<8x8xi32, #tpu.memory_space<vmem>>, vector<1x8xi32>
      %52 = vector.broadcast %51 : vector<1x8xi32> to vector<128x8xi32>
      %53 = arith.cmpi eq, %52, %25 : vector<128x8xi32>
      %54 = arith.extui %53 : vector<128x8xi1> to vector<128x8xi32>
      %55 = arith.sitofp %54 : vector<128x8xi32> to vector<128x8xf32>
      %56 = arith.addf %50, %55 : vector<128x8xf32>
      %c5 = arith.constant 5 : index
      %c0_15 = arith.constant 0 : index
      %57 = vector.load %arg2[%c5, %c0_15] : memref<8x8xi32, #tpu.memory_space<vmem>>, vector<1x8xi32>
      %58 = vector.broadcast %57 : vector<1x8xi32> to vector<128x8xi32>
      %59 = arith.cmpi eq, %58, %25 : vector<128x8xi32>
      %60 = arith.extui %59 : vector<128x8xi1> to vector<128x8xi32>
      %61 = arith.sitofp %60 : vector<128x8xi32> to vector<128x8xf32>
      %62 = arith.addf %56, %61 : vector<128x8xf32>
      %c6 = arith.constant 6 : index
      %c0_16 = arith.constant 0 : index
      %63 = vector.load %arg2[%c6, %c0_16] : memref<8x8xi32, #tpu.memory_space<vmem>>, vector<1x8xi32>
      %64 = vector.broadcast %63 : vector<1x8xi32> to vector<128x8xi32>
      %65 = arith.cmpi eq, %64, %25 : vector<128x8xi32>
      %66 = arith.extui %65 : vector<128x8xi1> to vector<128x8xi32>
      %67 = arith.sitofp %66 : vector<128x8xi32> to vector<128x8xf32>
      %68 = arith.addf %62, %67 : vector<128x8xf32>
      %c7 = arith.constant 7 : index
      %c0_17 = arith.constant 0 : index
      %69 = vector.load %arg2[%c7, %c0_17] : memref<8x8xi32, #tpu.memory_space<vmem>>, vector<1x8xi32>
      %70 = vector.broadcast %69 : vector<1x8xi32> to vector<128x8xi32>
      %71 = arith.cmpi eq, %70, %25 : vector<128x8xi32>
      %72 = arith.extui %71 : vector<128x8xi1> to vector<128x8xi32>
      %73 = arith.sitofp %72 : vector<128x8xi32> to vector<128x8xf32>
      %74 = arith.addf %68, %73 : vector<128x8xf32>
      %c0_18 = arith.constant 0 : index
      %c0_19 = arith.constant 0 : index
      %75 = vector.load %arg7[%c0_18, %c0_19] : memref<8x128xf32, #tpu.memory_space<vmem>>, vector<8x128xf32>
      %c0_20 = arith.constant 0 : index
      %c0_21 = arith.constant 0 : index
      %76 = vector.load %arg3[%c0_20, %c0_21] : memref<128x128xf32, #tpu.memory_space<vmem>>, vector<128x128xf32>
      %cst_22 = arith.constant dense<0.000000e+00> : vector<8x128xf32>
      %77 = tpu.matmul %74, %76, %cst_22 {dimension_numbers = #tpu.dot_dimension_numbers<[0], [0], [1], [1], [0, 1, 1, 1], [], []>} : vector<128x8xf32>, vector<128x128xf32>, vector<8x128xf32> -> vector<8x128xf32>
      %78 = arith.addf %75, %77 : vector<8x128xf32>
      %c0_23 = arith.constant 0 : index
      %c0_24 = arith.constant 0 : index
      %79 = vector.load %arg7[%c0_23, %c0_24] : memref<8x128xf32, #tpu.memory_space<vmem>>, vector<8x128xf32>
      tpu.vector_store %arg7[%c0_23, %c0_24], %78 {strides = array<i32>} : memref<8x128xf32, #tpu.memory_space<vmem>>, vector<8x128xf32>,
    } else {
    }
    %c0_i32_5 = arith.constant 0 : i32
    %19 = arith.cmpi eq, %arg1, %c0_i32_5 : i32
    %20 = arith.extui %19 : i1 to i32
    %c0_i32_6 = arith.constant 0 : i32
    %21 = arith.cmpi ne, %20, %c0_i32_6 : i32
    scf.if %21 {
      %c0_7 = arith.constant 0 : index
      %c0_8 = arith.constant 0 : index
      %22 = vector.load %arg7[%c0_7, %c0_8] : memref<8x128xf32, #tpu.memory_space<vmem>>, vector<8x128xf32>
      %cst_9 = arith.constant 1.250000e-01 : f32
      %23 = vector.broadcast %cst_9 : f32 to vector<8x128xf32>
      %24 = arith.mulf %22, %23 : vector<8x128xf32>
      %c0_10 = arith.constant 0 : index
      %c0_11 = arith.constant 0 : index
      %25 = vector.load %arg4[%c0_10, %c0_11] : memref<128x128xf32, #tpu.memory_space<vmem>>, vector<128x128xf32>
      %cst_12 = arith.constant dense<0.000000e+00> : vector<8x128xf32>
      %26 = tpu.matmul %24, %25, %cst_12 {dimension_numbers = #tpu.dot_dimension_numbers<[1], [0], [0], [1], [0, 0, 1, 1], [], []>} : vector<8x128xf32>, vector<128x128xf32>, vector<8x128xf32> -> vector<8x128xf32>
      %c0_13 = arith.constant 0 : index
      %c0_14 = arith.constant 0 : index
      %27 = vector.load %arg5[%c0_13, %c0_14] : memref<1x128xf32, #tpu.memory_space<vmem>>, vector<1x128xf32>
      %28 = vector.broadcast %27 : vector<1x128xf32> to vector<8x128xf32>
      %29 = arith.addf %26, %28 : vector<8x128xf32>
      %c0_15 = arith.constant 0 : index
      %c0_16 = arith.constant 0 : index
      %30 = vector.load %arg6[%c0_15, %c0_16] : memref<8x128xf32, #tpu.memory_space<vmem>>, vector<8x128xf32>
      tpu.vector_store %arg6[%c0_15, %c0_16], %29 {strides = array<i32>} : memref<8x128xf32, #tpu.memory_space<vmem>>, vector<8x128xf32>,
    } else {
    }
    return
  }
  func.func @transform_0(%arg0: i32, %arg1: i32) -> (i32, i32) {
    %c0_i32 = arith.constant 0 : i32
    %c0_i32_0 = arith.constant 0 : i32
    return %c0_i32, %arg0 : i32, i32
  }
  func.func @transform_1(%arg0: i32, %arg1: i32) -> (i32, i32) {
    %c0_i32 = arith.constant 0 : i32
    %c0_i32_0 = arith.constant 0 : i32
    return %arg1, %c0_i32 : i32, i32
  }
  func.func @transform_2(%arg0: i32, %arg1: i32) -> (i32, i32) {
    %c0_i32 = arith.constant 0 : i32
    %c0_i32_0 = arith.constant 0 : i32
    %c0_i32_1 = arith.constant 0 : i32
    return %c0_i32, %c0_i32_0 : i32, i32
  }
  func.func @transform_3(%arg0: i32, %arg1: i32) -> (i32, i32) {
    %c0_i32 = arith.constant 0 : i32
    %c0_i32_0 = arith.constant 0 : i32
    %c0_i32_1 = arith.constant 0 : i32
    return %c0_i32, %c0_i32_0 : i32, i32
  }
  func.func @transform_4(%arg0: i32, %arg1: i32) -> (i32, i32) {
    %c0_i32 = arith.constant 0 : i32
    %c0_i32_0 = arith.constant 0 : i32
    return %arg0, %c0_i32 : i32, i32
  }
}

</mosaic_0001>

<llo_original>
// kernel: tpu_custom_call.1
$region0: #{tpu_custom_call.1}
  #allocation0 [shape = 'u32[]', space=smem, size = 0x4, offset = 0x4, fixed_abs, tag = 'smem constant byte address 0x4 - core index']
  #allocation1 [shape = 'u32[144,128]{1,0:T(1,128)}', space=vmem, size = 0x12000, scoped, tag = 'internal scratch']
  #allocation2 [shape = 'f32[8,128]{1,0:T(8,128)}', space=vmem, size = 0x1000, scoped, tag = 'scratch operand']
  %s0 = inlined_call_operand.hbm [shape: s32[8,8], index: 0, kind: input, shape index: {}]
  %s1 = inlined_call_operand.hbm [shape: f32[128,128], index: 1, kind: input, shape index: {}]
  %s2 = inlined_call_operand.hbm [shape: f32[128,128], index: 2, kind: input, shape index: {}]
  %s3 = inlined_call_operand.vmem [shape: f32[1,128], index: 3, kind: input, shape index: {}]
  %s4 = inlined_call_operand.hbm [shape: f32[8,128], index: 4, kind: output, shape index: {}]
  %s5 = sld [smem:[#allocation0]]
  $region50: #{tpu_custom_call.1} parent=0
    _
  %s7 = ssub.s32 1, %s5
  %s8 = scalar_select 0, %s7, %s5
  $region1: #{tpu_custom_call.1} parent=0
    #allocation3 [shape = 'u8[4096]{0}', space=vmem, size = 0x1000, scoped, tag = 'input window, operand 0, single buffered']
    #allocation4 [shape = 's32[1]{0}', space=sflag, size = 0x4, scoped, tag = 'scoped memory for tpu_custom_call.1']
    #allocation5 [shape = 's32[1]{0}', space=sflag, size = 0x4, scoped, tag = 'scoped memory for tpu_custom_call.1']
    #allocation6 [shape = 'u8[65536]{0}', space=vmem, size = 0x10000, scoped, tag = 'input window, operand 1, single buffered']
    #allocation7 [shape = 's32[1]{0}', space=sflag, size = 0x4, scoped, tag = 'scoped memory for tpu_custom_call.1']
    #allocation8 [shape = 'u8[65536]{0}', space=vmem, size = 0x10000, scoped, tag = 'input window, operand 2, single buffered']
    #allocation9 [shape = 'u8[4096]{0}', space=vmem, size = 0x1000, scoped, tag = 'output window, operand 0, single buffered']
    %9 = vsyncpa [#allocation4], 0
    %10 = vsyncpa [#allocation7], 0
    %11 = vsyncpa [#allocation5], 0
    // Predicated region
    $region2: #{tpu_custom_call.1} parent=1 // pred_check
      _
    $region3: #{tpu_custom_call.1} parent=1 // pred_check_branch
      %13 = sbr.rel (0) target = $region5
    $region4: #{tpu_custom_call.1} parent=1 // pred_region
      %s15 = ssub.s32 128, 128
      %16 = vsyncadd [#allocation4], %s15
      %s18 = sshll.u32 [#allocation3], 4
      %s19 = int_to_ptr.vmem [resolvable:$true] %s18
      %21 = dma.hbm_to_vmem [thread:$0]  %s0, 128, %s19, [#allocation4]
    $region5: #{tpu_custom_call.1} parent=1 // pred_fallthru
      _
    // Predicated region
    $region6: #{tpu_custom_call.1} parent=1 // pred_check
      _
    $region7: #{tpu_custom_call.1} parent=1 // pred_check_branch
      %23 = sbr.rel (0) target = $region9
    $region8: #{tpu_custom_call.1} parent=1 // pred_region
      %s25 = ssub.s32 2048, 2048
      %26 = vsyncadd [#allocation7], %s25
      %s27 = sshll.u32 [#allocation6], 4
      %s28 = int_to_ptr.vmem [resolvable:$true] %s27
      %33 = dma.hbm_to_vmem [thread:$0]  %s1, 2048, %s28, [#allocation7], 128, 128, 8
    $region9: #{tpu_custom_call.1} parent=1 // pred_fallthru
      _
    // Predicated region
    $region10: #{tpu_custom_call.1} parent=1 // pred_check
      _
    $region11: #{tpu_custom_call.1} parent=1 // pred_check_branch
      %35 = sbr.rel (0) target = $region13
    $region12: #{tpu_custom_call.1} parent=1 // pred_region
      %s37 = ssub.s32 2048, 2048
      %38 = vsyncadd [#allocation7], %s37
      %s39 = sshll.u32 [#allocation8], 4
      %s40 = int_to_ptr.vmem [resolvable:$true] %s39
      %45 = dma.hbm_to_vmem [thread:$0]  %s2, 2048, %s40, [#allocation7], 128, 128, 8
    $region13: #{tpu_custom_call.1} parent=1 // pred_fallthru
      _
    // Predicated region
    $region14: #{tpu_custom_call.1} parent=1 // pred_check
      _
    $region15: #{tpu_custom_call.1} parent=1 // pred_check_branch
      %47 = sbr.rel (0) target = $region17
    $region16: #{tpu_custom_call.1} parent=1 // pred_region
      _
    $region17: #{tpu_custom_call.1} parent=1 // pred_fallthru
      _
    // Predicated region
    $region18: #{tpu_custom_call.1} parent=1 // pred_check
      _
    $region19: #{tpu_custom_call.1} parent=1 // pred_check_branch
      %49 = sbr.rel (0) target = $region21
    $region20: #{tpu_custom_call.1} parent=1 // pred_region
      %50 = dma.done [#allocation4], 128
    $region21: #{tpu_custom_call.1} parent=1 // pred_fallthru
      _
    // Predicated region
    $region22: #{tpu_custom_call.1} parent=1 // pred_check
      _
    $region23: #{tpu_custom_call.1} parent=1 // pred_check_branch
      %52 = sbr.rel (0) target = $region25
    $region24: #{tpu_custom_call.1} parent=1 // pred_region
      %53 = dma.done [#allocation7], 2048
    $region25: #{tpu_custom_call.1} parent=1 // pred_fallthru
      _
    // Predicated region
    $region26: #{tpu_custom_call.1} parent=1 // pred_check
      _
    $region27: #{tpu_custom_call.1} parent=1 // pred_check_branch
      %55 = sbr.rel (0) target = $region29
    $region28: #{tpu_custom_call.1} parent=1 // pred_region
      %56 = dma.done [#allocation7], 2048
    $region29: #{tpu_custom_call.1} parent=1 // pred_fallthru
      _
    %s57 = smul.u32 0, 128
    %p58 = scmp.eq.s32.totalorder 0, 0
    // Predicated region
    $region30: #{tpu_custom_call.1} parent=1 // pred_check
      %p59 = pneg %p58
    $region31: #{tpu_custom_call.1} parent=1 // pred_check_branch
      %61 = sbr.rel (%p59) target = $region33
    $region32: #{tpu_custom_call.1} parent=1 // pred_region
      %62 = vst [vmem:[#allocation2] sm:$0xff] 0.0
    $region33: #{tpu_custom_call.1} parent=1 // pred_fallthru
      _
    %v63 = vld [vmem:[#allocation3] sm:$0xff]
    %v64 = vstv %s57
    %vm65 = vcmp.ge.s32.totalorder %v63, %v64
    %s66 = sadd.s32 %s57, 128
    %v67 = vstv %s66
    %vm68 = vcmp.lt.s32.totalorder %v63, %v67
    %vm69 = vmand %vm65, %vm68
    %v70 = vsel %vm69, 1, 0
    %vm71 = vcmask 64512
    %v72 = vsel %vm71, %v70, 2147483648
    %v73 = vand.u32 %v72, 65535
    %v74 = vshra.s32 %v72, 16
    %v75 = vcvt.s32.f32 %v73
    %v76 = vcvt.s32.f32 %v74
    %77 = vmax.xlane.f32.xlu0 %v76
    %v78 = vpop.xlane.xlu0 %77
    %vm79 = vcmp.eq.f32.partialorder %v76, %v78
    %v80 = vsel %vm79, %v75, -inf
    %81 = vmax.xlane.f32.xlu0 %v80
    %v82 = vpop.xlane.xlu0 %81
    %v83 = vcvt.f32.s32 %v82
    %v84 = vcvt.f32.s32 %v78
    %v85 = vshll.u32 %v84, 16
    %v86 = vadd.s32 %v85, %v83
    %v87 = vrot.slane %v86, 4
    %vm88 = vcmp.gt.s32.totalorder %v86, %v87
    %v89 = vsel %vm88, %v86, %v87
    %v90 = vrot.slane %v89, 2
    %vm91 = vcmp.gt.s32.totalorder %v89, %v90
    %v92 = vsel %vm91, %v89, %v90
    %v93 = vrot.slane %v92, 1
    %vm94 = vcmp.gt.s32.totalorder %v92, %v93
    %v95 = vsel %vm94, %v92, %v93
    %s96 = vtos %v95
    %p97 = scmp.gt.s32.totalorder %s96, 0
    // Predicated region
    $region34: #{tpu_custom_call.1} parent=1 // pred_check
      %p98 = pneg %p97
    $region35: #{tpu_custom_call.1} parent=1 // pred_check_branch
      %100 = sbr.rel (%p98) target = $region37
    $region36: #{tpu_custom_call.1} parent=1 // pred_region
      %v101 = vlaneseq
      %v102 = vshrl.u32 %v101, 7
      %v103 = vadd.s32 %v102, 8
      %v104 = vadd.s32 %v102, 16
      %v105 = vadd.s32 %v102, 24
      %v106 = vadd.s32 %v102, 32
      %v107 = vadd.s32 %v102, 40
      %v108 = vadd.s32 %v102, 48
      %v109 = vadd.s32 %v102, 56
      %v110 = vadd.s32 %v102, 64
      %v111 = vadd.s32 %v102, 72
      %v112 = vadd.s32 %v102, 80
      %v113 = vadd.s32 %v102, 88
      %v114 = vadd.s32 %v102, 96
      %v115 = vadd.s32 %v102, 104
      %v116 = vadd.s32 %v102, 112
      %v117 = vadd.s32 %v102, 120
      %v118 = vadd.s32 %v102, %v64
      %v119 = vadd.s32 %v103, %v64
      %v120 = vadd.s32 %v104, %v64
      %v121 = vadd.s32 %v105, %v64
      %v122 = vadd.s32 %v106, %v64
      %v123 = vadd.s32 %v107, %v64
      %v124 = vadd.s32 %v108, %v64
      %v125 = vadd.s32 %v109, %v64
      %v126 = vadd.s32 %v110, %v64
      %v127 = vadd.s32 %v111, %v64
      %v128 = vadd.s32 %v112, %v64
      %v129 = vadd.s32 %v113, %v64
      %v130 = vadd.s32 %v114, %v64
      %v131 = vadd.s32 %v115, %v64
      %v132 = vadd.s32 %v116, %v64
      %v133 = vadd.s32 %v117, %v64
      %v134 = vld [vmem:[#allocation3] sm:$0x1]
      %v135 = vlaneseq
      %v136 = vshrl.u32 %v135, 7
      %v137 = vsub.s32 0, %v136
      %v138 = vrot.slane %v134, %v137
      %vm139 = vcmp.eq.s32.totalorder %v138, %v118
      %vm140 = vcmp.eq.s32.totalorder %v138, %v119
      %vm141 = vcmp.eq.s32.totalorder %v138, %v120
      %vm142 = vcmp.eq.s32.totalorder %v138, %v121
      %vm143 = vcmp.eq.s32.totalorder %v138, %v122
      %vm144 = vcmp.eq.s32.totalorder %v138, %v123
      %vm145 = vcmp.eq.s32.totalorder %v138, %v124
      %vm146 = vcmp.eq.s32.totalorder %v138, %v125
      %vm147 = vcmp.eq.s32.totalorder %v138, %v126
      %vm148 = vcmp.eq.s32.totalorder %v138, %v127
      %vm149 = vcmp.eq.s32.totalorder %v138, %v128
      %vm150 = vcmp.eq.s32.totalorder %v138, %v129
      %vm151 = vcmp.eq.s32.totalorder %v138, %v130
      %vm152 = vcmp.eq.s32.totalorder %v138, %v131
      %vm153 = vcmp.eq.s32.totalorder %v138, %v132
      %vm154 = vcmp.eq.s32.totalorder %v138, %v133
      %v155 = vsel %vm139, 1, 0
      %v156 = vsel %vm140, 1, 0
      %v157 = vsel %vm141, 1, 0
      %v158 = vsel %vm142, 1, 0
      %v159 = vsel %vm143, 1, 0
      %v160 = vsel %vm144, 1, 0
      %v161 = vsel %vm145, 1, 0
      %v162 = vsel %vm146, 1, 0
      %v163 = vsel %vm147, 1, 0
      %v164 = vsel %vm148, 1, 0
      %v165 = vsel %vm149, 1, 0
      %v166 = vsel %vm150, 1, 0
      %v167 = vsel %vm151, 1, 0
      %v168 = vsel %vm152, 1, 0
      %v169 = vsel %vm153, 1, 0
      %v170 = vsel %vm154, 1, 0
      %v171 = vcvt.s32.f32 %v155
      %v172 = vcvt.s32.f32 %v156
      %v173 = vcvt.s32.f32 %v157
      %v174 = vcvt.s32.f32 %v158
      %v175 = vcvt.s32.f32 %v159
      %v176 = vcvt.s32.f32 %v160
      %v177 = vcvt.s32.f32 %v161
      %v178 = vcvt.s32.f32 %v162
      %v179 = vcvt.s32.f32 %v163
      %v180 = vcvt.s32.f32 %v164
      %v181 = vcvt.s32.f32 %v165
      %v182 = vcvt.s32.f32 %v166
      %v183 = vcvt.s32.f32 %v167
      %v184 = vcvt.s32.f32 %v168
      %v185 = vcvt.s32.f32 %v169
      %v186 = vcvt.s32.f32 %v170
      %v187 = vadd.f32 %v171, 0.0
      %v188 = vadd.f32 %v172, 0.0
      %v189 = vadd.f32 %v173, 0.0
      %v190 = vadd.f32 %v174, 0.0
      %v191 = vadd.f32 %v175, 0.0
      %v192 = vadd.f32 %v176, 0.0
      %v193 = vadd.f32 %v177, 0.0
      %v194 = vadd.f32 %v178, 0.0
      %v195 = vadd.f32 %v179, 0.0
      %v196 = vadd.f32 %v180, 0.0
      %v197 = vadd.f32 %v181, 0.0
      %v198 = vadd.f32 %v182, 0.0
      %v199 = vadd.f32 %v183, 0.0
      %v200 = vadd.f32 %v184, 0.0
      %v201 = vadd.f32 %v185, 0.0
      %v202 = vadd.f32 %v186, 0.0
      %v203 = vld [vmem:[#allocation3 + $0x1] sm:$0x1]
      %v204 = vlaneseq
      %v205 = vshrl.u32 %v204, 7
      %v206 = vsub.s32 0, %v205
      %v207 = vrot.slane %v203, %v206
      %vm208 = vcmp.eq.s32.totalorder %v207, %v118
      %vm209 = vcmp.eq.s32.totalorder %v207, %v119
      %vm210 = vcmp.eq.s32.totalorder %v207, %v120
      %vm211 = vcmp.eq.s32.totalorder %v207, %v121
      %vm212 = vcmp.eq.s32.totalorder %v207, %v122
      %vm213 = vcmp.eq.s32.totalorder %v207, %v123
      %vm214 = vcmp.eq.s32.totalorder %v207, %v124
      %vm215 = vcmp.eq.s32.totalorder %v207, %v125
      %vm216 = vcmp.eq.s32.totalorder %v207, %v126
      %vm217 = vcmp.eq.s32.totalorder %v207, %v127
      %vm218 = vcmp.eq.s32.totalorder %v207, %v128
      %vm219 = vcmp.eq.s32.totalorder %v207, %v129
      %vm220 = vcmp.eq.s32.totalorder %v207, %v130
      %vm221 = vcmp.eq.s32.totalorder %v207, %v131
      %vm222 = vcmp.eq.s32.totalorder %v207, %v132
      %vm223 = vcmp.eq.s32.totalorder %v207, %v133
      %v224 = vsel %vm208, 1, 0
      %v225 = vsel %vm209, 1, 0
      %v226 = vsel %vm210, 1, 0
      %v227 = vsel %vm211, 1, 0
      %v228 = vsel %vm212, 1, 0
      %v229 = vsel %vm213, 1, 0
      %v230 = vsel %vm214, 1, 0
      %v231 = vsel %vm215, 1, 0
      %v232 = vsel %vm216, 1, 0
      %v233 = vsel %vm217, 1, 0
      %v234 = vsel %vm218, 1, 0
      %v235 = vsel %vm219, 1, 0
      %v236 = vsel %vm220, 1, 0
      %v237 = vsel %vm221, 1, 0
      %v238 = vsel %vm222, 1, 0
      %v239 = vsel %vm223, 1, 0
      %v240 = vcvt.s32.f32 %v224
      %v241 = vcvt.s32.f32 %v225
      %v242 = vcvt.s32.f32 %v226
      %v243 = vcvt.s32.f32 %v227
      %v244 = vcvt.s32.f32 %v228
      %v245 = vcvt.s32.f32 %v229
      %v246 = vcvt.s32.f32 %v230
      %v247 = vcvt.s32.f32 %v231
      %v248 = vcvt.s32.f32 %v232
      %v249 = vcvt.s32.f32 %v233
      %v250 = vcvt.s32.f32 %v234
      %v251 = vcvt.s32.f32 %v235
      %v252 = vcvt.s32.f32 %v236
      %v253 = vcvt.s32.f32 %v237
      %v254 = vcvt.s32.f32 %v238
      %v255 = vcvt.s32.f32 %v239
      %v256 = vadd.f32 %v187, %v240
      %v257 = vadd.f32 %v188, %v241
      %v258 = vadd.f32 %v189, %v242
      %v259 = vadd.f32 %v190, %v243
      %v260 = vadd.f32 %v191, %v244
      %v261 = vadd.f32 %v192, %v245
      %v262 = vadd.f32 %v193, %v246
      %v263 = vadd.f32 %v194, %v247
      %v264 = vadd.f32 %v195, %v248
      %v265 = vadd.f32 %v196, %v249
      %v266 = vadd.f32 %v197, %v250
      %v267 = vadd.f32 %v198, %v251
      %v268 = vadd.f32 %v199, %v252
      %v269 = vadd.f32 %v200, %v253
      %v270 = vadd.f32 %v201, %v254
      %v271 = vadd.f32 %v202, %v255
      %v272 = vld [vmem:[#allocation3 + $0x2] sm:$0x1]
      %v273 = vlaneseq
      %v274 = vshrl.u32 %v273, 7
      %v275 = vsub.s32 0, %v274
      %v276 = vrot.slane %v272, %v275
      %vm277 = vcmp.eq.s32.totalorder %v276, %v118
      %vm278 = vcmp.eq.s32.totalorder %v276, %v119
      %vm279 = vcmp.eq.s32.totalorder %v276, %v120
      %vm280 = vcmp.eq.s32.totalorder %v276, %v121
      %vm281 = vcmp.eq.s32.totalorder %v276, %v122
      %vm282 = vcmp.eq.s32.totalorder %v276, %v123
      %vm283 = vcmp.eq.s32.totalorder %v276, %v124
      %vm284 = vcmp.eq.s32.totalorder %v276, %v125
      %vm285 = vcmp.eq.s32.totalorder %v276, %v126
      %vm286 = vcmp.eq.s32.totalorder %v276, %v127
      %vm287 = vcmp.eq.s32.totalorder %v276, %v128
      %vm288 = vcmp.eq.s32.totalorder %v276, %v129
      %vm289 = vcmp.eq.s32.totalorder %v276, %v130
      %vm290 = vcmp.eq.s32.totalorder %v276, %v131
      %vm291 = vcmp.eq.s32.totalorder %v276, %v132
      %vm292 = vcmp.eq.s32.totalorder %v276, %v133
      %v293 = vsel %vm277, 1, 0
      %v294 = vsel %vm278, 1, 0
      %v295 = vsel %vm279, 1, 0
      %v296 = vsel %vm280, 1, 0
      %v297 = vsel %vm281, 1, 0
      %v298 = vsel %vm282, 1, 0
      %v299 = vsel %vm283, 1, 0
      %v300 = vsel %vm284, 1, 0
      %v301 = vsel %vm285, 1, 0
      %v302 = vsel %vm286, 1, 0
      %v303 = vsel %vm287, 1, 0
      %v304 = vsel %vm288, 1, 0
      %v305 = vsel %vm289, 1, 0
      %v306 = vsel %vm290, 1, 0
      %v307 = vsel %vm291, 1, 0
      %v308 = vsel %vm292, 1, 0
      %v309 = vcvt.s32.f32 %v293
      %v310 = vcvt.s32.f32 %v294
      %v311 = vcvt.s32.f32 %v295
      %v312 = vcvt.s32.f32 %v296
      %v313 = vcvt.s32.f32 %v297
      %v314 = vcvt.s32.f32 %v298
      %v315 = vcvt.s32.f32 %v299
      %v316 = vcvt.s32.f32 %v300
      %v317 = vcvt.s32.f32 %v301
      %v318 = vcvt.s32.f32 %v302
      %v319 = vcvt.s32.f32 %v303
      %v320 = vcvt.s32.f32 %v304
      %v321 = vcvt.s32.f32 %v305
      %v322 = vcvt.s32.f32 %v306
      %v323 = vcvt.s32.f32 %v307
      %v324 = vcvt.s32.f32 %v308
      %v325 = vadd.f32 %v256, %v309
      %v326 = vadd.f32 %v257, %v310
      %v327 = vadd.f32 %v258, %v311
      %v328 = vadd.f32 %v259, %v312
      %v329 = vadd.f32 %v260, %v313
      %v330 = vadd.f32 %v261, %v314
      %v331 = vadd.f32 %v262, %v315
      %v332 = vadd.f32 %v263, %v316
      %v333 = vadd.f32 %v264, %v317
      %v334 = vadd.f32 %v265, %v318
      %v335 = vadd.f32 %v266, %v319
      %v336 = vadd.f32 %v267, %v320
      %v337 = vadd.f32 %v268, %v321
      %v338 = vadd.f32 %v269, %v322
      %v339 = vadd.f32 %v270, %v323
      %v340 = vadd.f32 %v271, %v324
      %v341 = vld [vmem:[#allocation3 + $0x3] sm:$0x1]
      %v342 = vlaneseq
      %v343 = vshrl.u32 %v342, 7
      %v344 = vsub.s32 0, %v343
      %v345 = vrot.slane %v341, %v344
      %vm346 = vcmp.eq.s32.totalorder %v345, %v118
      %vm347 = vcmp.eq.s32.totalorder %v345, %v119
      %vm348 = vcmp.eq.s32.totalorder %v345, %v120
      %vm349 = vcmp.eq.s32.totalorder %v345, %v121
      %vm350 = vcmp.eq.s32.totalorder %v345, %v122
      %vm351 = vcmp.eq.s32.totalorder %v345, %v123
      %vm352 = vcmp.eq.s32.totalorder %v345, %v124
      %vm353 = vcmp.eq.s32.totalorder %v345, %v125
      %vm354 = vcmp.eq.s32.totalorder %v345, %v126
      %vm355 = vcmp.eq.s32.totalorder %v345, %v127
      %vm356 = vcmp.eq.s32.totalorder %v345, %v128
      %vm357 = vcmp.eq.s32.totalorder %v345, %v129
      %vm358 = vcmp.eq.s32.totalorder %v345, %v130
      %vm359 = vcmp.eq.s32.totalorder %v345, %v131
      %vm360 = vcmp.eq.s32.totalorder %v345, %v132
      %vm361 = vcmp.eq.s32.totalorder %v345, %v133
      %v362 = vsel %vm346, 1, 0
      %v363 = vsel %vm347, 1, 0
      %v364 = vsel %vm348, 1, 0
      %v365 = vsel %vm349, 1, 0
      %v366 = vsel %vm350, 1, 0
      %v367 = vsel %vm351, 1, 0
      %v368 = vsel %vm352, 1, 0
      %v369 = vsel %vm353, 1, 0
      %v370 = vsel %vm354, 1, 0
      %v371 = vsel %vm355, 1, 0
      %v372 = vsel %vm356, 1, 0
      %v373 = vsel %vm357, 1, 0
      %v374 = vsel %vm358, 1, 0
      %v375 = vsel %vm359, 1, 0
      %v376 = vsel %vm360, 1, 0
      %v377 = vsel %vm361, 1, 0
      %v378 = vcvt.s32.f32 %v362
      %v379 = vcvt.s32.f32 %v363
      %v380 = vcvt.s32.f32 %v364
      %v381 = vcvt.s32.f32 %v365
      %v382 = vcvt.s32.f32 %v366
      %v383 = vcvt.s32.f32 %v367
      %v384 = vcvt.s32.f32 %v368
      %v385 = vcvt.s32.f32 %v369
      %v386 = vcvt.s32.f32 %v370
      %v387 = vcvt.s32.f32 %v371
      %v388 = vcvt.s32.f32 %v372
      %v389 = vcvt.s32.f32 %v373
      %v390 = vcvt.s32.f32 %v374
      %v391 = vcvt.s32.f32 %v375
      %v392 = vcvt.s32.f32 %v376
      %v393 = vcvt.s32.f32 %v377
      %v394 = vadd.f32 %v325, %v378
      %v395 = vadd.f32 %v326, %v379
      %v396 = vadd.f32 %v327, %v380
      %v397 = vadd.f32 %v328, %v381
      %v398 = vadd.f32 %v329, %v382
      %v399 = vadd.f32 %v330, %v383
      %v400 = vadd.f32 %v331, %v384
      %v401 = vadd.f32 %v332, %v385
      %v402 = vadd.f32 %v333, %v386
      %v403 = vadd.f32 %v334, %v387
      %v404 = vadd.f32 %v335, %v388
      %v405 = vadd.f32 %v336, %v389
      %v406 = vadd.f32 %v337, %v390
      %v407 = vadd.f32 %v338, %v391
      %v408 = vadd.f32 %v339, %v392
      %v409 = vadd.f32 %v340, %v393
      %v410 = vld [vmem:[#allocation3 + $0x4] sm:$0x1]
      %v411 = vlaneseq
      %v412 = vshrl.u32 %v411, 7
      %v413 = vsub.s32 0, %v412
      %v414 = vrot.slane %v410, %v413
      %vm415 = vcmp.eq.s32.totalorder %v414, %v118
      %vm416 = vcmp.eq.s32.totalorder %v414, %v119
      %vm417 = vcmp.eq.s32.totalorder %v414, %v120
      %vm418 = vcmp.eq.s32.totalorder %v414, %v121
      %vm419 = vcmp.eq.s32.totalorder %v414, %v122
      %vm420 = vcmp.eq.s32.totalorder %v414, %v123
      %vm421 = vcmp.eq.s32.totalorder %v414, %v124
      %vm422 = vcmp.eq.s32.totalorder %v414, %v125
      %vm423 = vcmp.eq.s32.totalorder %v414, %v126
      %vm424 = vcmp.eq.s32.totalorder %v414, %v127
      %vm425 = vcmp.eq.s32.totalorder %v414, %v128
      %vm426 = vcmp.eq.s32.totalorder %v414, %v129
      %vm427 = vcmp.eq.s32.totalorder %v414, %v130
      %vm428 = vcmp.eq.s32.totalorder %v414, %v131
      %vm429 = vcmp.eq.s32.totalorder %v414, %v132
      %vm430 = vcmp.eq.s32.totalorder %v414, %v133
      %v431 = vsel %vm415, 1, 0
      %v432 = vsel %vm416, 1, 0
      %v433 = vsel %vm417, 1, 0
      %v434 = vsel %vm418, 1, 0
      %v435 = vsel %vm419, 1, 0
      %v436 = vsel %vm420, 1, 0
      %v437 = vsel %vm421, 1, 0
      %v438 = vsel %vm422, 1, 0
      %v439 = vsel %vm423, 1, 0
      %v440 = vsel %vm424, 1, 0
      %v441 = vsel %vm425, 1, 0
      %v442 = vsel %vm426, 1, 0
      %v443 = vsel %vm427, 1, 0
      %v444 = vsel %vm428, 1, 0
      %v445 = vsel %vm429, 1, 0
      %v446 = vsel %vm430, 1, 0
      %v447 = vcvt.s32.f32 %v431
      %v448 = vcvt.s32.f32 %v432
      %v449 = vcvt.s32.f32 %v433
      %v450 = vcvt.s32.f32 %v434
      %v451 = vcvt.s32.f32 %v435
      %v452 = vcvt.s32.f32 %v436
      %v453 = vcvt.s32.f32 %v437
      %v454 = vcvt.s32.f32 %v438
      %v455 = vcvt.s32.f32 %v439
      %v456 = vcvt.s32.f32 %v440
      %v457 = vcvt.s32.f32 %v441
      %v458 = vcvt.s32.f32 %v442
      %v459 = vcvt.s32.f32 %v443
      %v460 = vcvt.s32.f32 %v444
      %v461 = vcvt.s32.f32 %v445
      %v462 = vcvt.s32.f32 %v446
      %v463 = vadd.f32 %v394, %v447
      %v464 = vadd.f32 %v395, %v448
      %v465 = vadd.f32 %v396, %v449
      %v466 = vadd.f32 %v397, %v450
      %v467 = vadd.f32 %v398, %v451
      %v468 = vadd.f32 %v399, %v452
      %v469 = vadd.f32 %v400, %v453
      %v470 = vadd.f32 %v401, %v454
      %v471 = vadd.f32 %v402, %v455
      %v472 = vadd.f32 %v403, %v456
      %v473 = vadd.f32 %v404, %v457
      %v474 = vadd.f32 %v405, %v458
      %v475 = vadd.f32 %v406, %v459
      %v476 = vadd.f32 %v407, %v460
      %v477 = vadd.f32 %v408, %v461
      %v478 = vadd.f32 %v409, %v462
      %v479 = vld [vmem:[#allocation3 + $0x5] sm:$0x1]
      %v480 = vlaneseq
      %v481 = vshrl.u32 %v480, 7
      %v482 = vsub.s32 0, %v481
      %v483 = vrot.slane %v479, %v482
      %vm484 = vcmp.eq.s32.totalorder %v483, %v118
      %vm485 = vcmp.eq.s32.totalorder %v483, %v119
      %vm486 = vcmp.eq.s32.totalorder %v483, %v120
      %vm487 = vcmp.eq.s32.totalorder %v483, %v121
      %vm488 = vcmp.eq.s32.totalorder %v483, %v122
      %vm489 = vcmp.eq.s32.totalorder %v483, %v123
      %vm490 = vcmp.eq.s32.totalorder %v483, %v124
      %vm491 = vcmp.eq.s32.totalorder %v483, %v125
      %vm492 = vcmp.eq.s32.totalorder %v483, %v126
      %vm493 = vcmp.eq.s32.totalorder %v483, %v127
      %vm494 = vcmp.eq.s32.totalorder %v483, %v128
      %vm495 = vcmp.eq.s32.totalorder %v483, %v129
      %vm496 = vcmp.eq.s32.totalorder %v483, %v130
      %vm497 = vcmp.eq.s32.totalorder %v483, %v131
      %vm498 = vcmp.eq.s32.totalorder %v483, %v132
      %vm499 = vcmp.eq.s32.totalorder %v483, %v133
      %v500 = vsel %vm484, 1, 0
      %v501 = vsel %vm485, 1, 0
      %v502 = vsel %vm486, 1, 0
      %v503 = vsel %vm487, 1, 0
      %v504 = vsel %vm488, 1, 0
      %v505 = vsel %vm489, 1, 0
      %v506 = vsel %vm490, 1, 0
      %v507 = vsel %vm491, 1, 0
      %v508 = vsel %vm492, 1, 0
      %v509 = vsel %vm493, 1, 0
      %v510 = vsel %vm494, 1, 0
      %v511 = vsel %vm495, 1, 0
      %v512 = vsel %vm496, 1, 0
      %v513 = vsel %vm497, 1, 0
      %v514 = vsel %vm498, 1, 0
      %v515 = vsel %vm499, 1, 0
      %v516 = vcvt.s32.f32 %v500
      %v517 = vcvt.s32.f32 %v501
      %v518 = vcvt.s32.f32 %v502
      %v519 = vcvt.s32.f32 %v503
      %v520 = vcvt.s32.f32 %v504
      %v521 = vcvt.s32.f32 %v505
      %v522 = vcvt.s32.f32 %v506
      %v523 = vcvt.s32.f32 %v507
      %v524 = vcvt.s32.f32 %v508
      %v525 = vcvt.s32.f32 %v509
      %v526 = vcvt.s32.f32 %v510
      %v527 = vcvt.s32.f32 %v511
      %v528 = vcvt.s32.f32 %v512
      %v529 = vcvt.s32.f32 %v513
      %v530 = vcvt.s32.f32 %v514
      %v531 = vcvt.s32.f32 %v515
      %v532 = vadd.f32 %v463, %v516
      %v533 = vadd.f32 %v464, %v517
      %v534 = vadd.f32 %v465, %v518
      %v535 = vadd.f32 %v466, %v519
      %v536 = vadd.f32 %v467, %v520
      %v537 = vadd.f32 %v468, %v521
      %v538 = vadd.f32 %v469, %v522
      %v539 = vadd.f32 %v470, %v523
      %v540 = vadd.f32 %v471, %v524
      %v541 = vadd.f32 %v472, %v525
      %v542 = vadd.f32 %v473, %v526
      %v543 = vadd.f32 %v474, %v527
      %v544 = vadd.f32 %v475, %v528
      %v545 = vadd.f32 %v476, %v529
      %v546 = vadd.f32 %v477, %v530
      %v547 = vadd.f32 %v478, %v531
      %v548 = vld [vmem:[#allocation3 + $0x6] sm:$0x1]
      %v549 = vlaneseq
      %v550 = vshrl.u32 %v549, 7
      %v551 = vsub.s32 0, %v550
      %v552 = vrot.slane %v548, %v551
      %vm553 = vcmp.eq.s32.totalorder %v552, %v118
      %vm554 = vcmp.eq.s32.totalorder %v552, %v119
      %vm555 = vcmp.eq.s32.totalorder %v552, %v120
      %vm556 = vcmp.eq.s32.totalorder %v552, %v121
      %vm557 = vcmp.eq.s32.totalorder %v552, %v122
      %vm558 = vcmp.eq.s32.totalorder %v552, %v123
      %vm559 = vcmp.eq.s32.totalorder %v552, %v124
      %vm560 = vcmp.eq.s32.totalorder %v552, %v125
      %vm561 = vcmp.eq.s32.totalorder %v552, %v126
      %vm562 = vcmp.eq.s32.totalorder %v552, %v127
      %vm563 = vcmp.eq.s32.totalorder %v552, %v128
      %vm564 = vcmp.eq.s32.totalorder %v552, %v129
      %vm565 = vcmp.eq.s32.totalorder %v552, %v130
      %vm566 = vcmp.eq.s32.totalorder %v552, %v131
      %vm567 = vcmp.eq.s32.totalorder %v552, %v132
      %vm568 = vcmp.eq.s32.totalorder %v552, %v133
      %v569 = vsel %vm553, 1, 0
      %v570 = vsel %vm554, 1, 0
      %v571 = vsel %vm555, 1, 0
      %v572 = vsel %vm556, 1, 0
      %v573 = vsel %vm557, 1, 0
      %v574 = vsel %vm558, 1, 0
      %v575 = vsel %vm559, 1, 0
      %v576 = vsel %vm560, 1, 0
      %v577 = vsel %vm561, 1, 0
      %v578 = vsel %vm562, 1, 0
      %v579 = vsel %vm563, 1, 0
      %v580 = vsel %vm564, 1, 0
      %v581 = vsel %vm565, 1, 0
      %v582 = vsel %vm566, 1, 0
      %v583 = vsel %vm567, 1, 0
      %v584 = vsel %vm568, 1, 0
      %v585 = vcvt.s32.f32 %v569
      %v586 = vcvt.s32.f32 %v570
      %v587 = vcvt.s32.f32 %v571
      %v588 = vcvt.s32.f32 %v572
      %v589 = vcvt.s32.f32 %v573
      %v590 = vcvt.s32.f32 %v574
      %v591 = vcvt.s32.f32 %v575
      %v592 = vcvt.s32.f32 %v576
      %v593 = vcvt.s32.f32 %v577
      %v594 = vcvt.s32.f32 %v578
      %v595 = vcvt.s32.f32 %v579
      %v596 = vcvt.s32.f32 %v580
      %v597 = vcvt.s32.f32 %v581
      %v598 = vcvt.s32.f32 %v582
      %v599 = vcvt.s32.f32 %v583
      %v600 = vcvt.s32.f32 %v584
      %v601 = vadd.f32 %v532, %v585
      %v602 = vadd.f32 %v533, %v586
      %v603 = vadd.f32 %v534, %v587
      %v604 = vadd.f32 %v535, %v588
      %v605 = vadd.f32 %v536, %v589
      %v606 = vadd.f32 %v537, %v590
      %v607 = vadd.f32 %v538, %v591
      %v608 = vadd.f32 %v539, %v592
      %v609 = vadd.f32 %v540, %v593
      %v610 = vadd.f32 %v541, %v594
      %v611 = vadd.f32 %v542, %v595
      %v612 = vadd.f32 %v543, %v596
      %v613 = vadd.f32 %v544, %v597
      %v614 = vadd.f32 %v545, %v598
      %v615 = vadd.f32 %v546, %v599
      %v616 = vadd.f32 %v547, %v600
      %v617 = vld [vmem:[#allocation3 + $0x7] sm:$0x1]
      %v618 = vlaneseq
      %v619 = vshrl.u32 %v618, 7
      %v620 = vsub.s32 0, %v619
      %v621 = vrot.slane %v617, %v620
      %vm622 = vcmp.eq.s32.totalorder %v621, %v118
      %vm623 = vcmp.eq.s32.totalorder %v621, %v119
      %vm624 = vcmp.eq.s32.totalorder %v621, %v120
      %vm625 = vcmp.eq.s32.totalorder %v621, %v121
      %vm626 = vcmp.eq.s32.totalorder %v621, %v122
      %vm627 = vcmp.eq.s32.totalorder %v621, %v123
      %vm628 = vcmp.eq.s32.totalorder %v621, %v124
      %vm629 = vcmp.eq.s32.totalorder %v621, %v125
      %vm630 = vcmp.eq.s32.totalorder %v621, %v126
      %vm631 = vcmp.eq.s32.totalorder %v621, %v127
      %vm632 = vcmp.eq.s32.totalorder %v621, %v128
      %vm633 = vcmp.eq.s32.totalorder %v621, %v129
      %vm634 = vcmp.eq.s32.totalorder %v621, %v130
      %vm635 = vcmp.eq.s32.totalorder %v621, %v131
      %vm636 = vcmp.eq.s32.totalorder %v621, %v132
      %vm637 = vcmp.eq.s32.totalorder %v621, %v133
      %v638 = vsel %vm622, 1, 0
      %v639 = vsel %vm623, 1, 0
      %v640 = vsel %vm624, 1, 0
      %v641 = vsel %vm625, 1, 0
      %v642 = vsel %vm626, 1, 0
      %v643 = vsel %vm627, 1, 0
      %v644 = vsel %vm628, 1, 0
      %v645 = vsel %vm629, 1, 0
      %v646 = vsel %vm630, 1, 0
      %v647 = vsel %vm631, 1, 0
      %v648 = vsel %vm632, 1, 0
      %v649 = vsel %vm633, 1, 0
      %v650 = vsel %vm634, 1, 0
      %v651 = vsel %vm635, 1, 0
      %v652 = vsel %vm636, 1, 0
      %v653 = vsel %vm637, 1, 0
      %v654 = vcvt.s32.f32 %v638
      %v655 = vcvt.s32.f32 %v639
      %v656 = vcvt.s32.f32 %v640
      %v657 = vcvt.s32.f32 %v641
      %v658 = vcvt.s32.f32 %v642
      %v659 = vcvt.s32.f32 %v643
      %v660 = vcvt.s32.f32 %v644
      %v661 = vcvt.s32.f32 %v645
      %v662 = vcvt.s32.f32 %v646
      %v663 = vcvt.s32.f32 %v647
      %v664 = vcvt.s32.f32 %v648
      %v665 = vcvt.s32.f32 %v649
      %v666 = vcvt.s32.f32 %v650
      %v667 = vcvt.s32.f32 %v651
      %v668 = vcvt.s32.f32 %v652
      %v669 = vcvt.s32.f32 %v653
      %v670 = vadd.f32 %v601, %v654
      %v671 = vadd.f32 %v602, %v655
      %v672 = vadd.f32 %v603, %v656
      %v673 = vadd.f32 %v604, %v657
      %v674 = vadd.f32 %v605, %v658
      %v675 = vadd.f32 %v606, %v659
      %v676 = vadd.f32 %v607, %v660
      %v677 = vadd.f32 %v608, %v661
      %v678 = vadd.f32 %v609, %v662
      %v679 = vadd.f32 %v610, %v663
      %v680 = vadd.f32 %v611, %v664
      %v681 = vadd.f32 %v612, %v665
      %v682 = vadd.f32 %v613, %v666
      %v683 = vadd.f32 %v614, %v667
      %v684 = vadd.f32 %v615, %v668
      %v685 = vadd.f32 %v616, %v669
      %v686 = vld [vmem:[#allocation2] sm:$0xff]
      %v687 = vld [vmem:[#allocation6] sm:$0xff]
      %v688 = vld [vmem:[#allocation6 + $0x8] sm:$0xff]
      %v689 = vld [vmem:[#allocation6 + $0x10] sm:$0xff]
      %v690 = vld [vmem:[#allocation6 + $0x18] sm:$0xff]
      %v691 = vld [vmem:[#allocation6 + $0x20] sm:$0xff]
      %v692 = vld [vmem:[#allocation6 + $0x28] sm:$0xff]
      %v693 = vld [vmem:[#allocation6 + $0x30] sm:$0xff]
      %v694 = vld [vmem:[#allocation6 + $0x38] sm:$0xff]
      %v695 = vld [vmem:[#allocation6 + $0x40] sm:$0xff]
      %v696 = vld [vmem:[#allocation6 + $0x48] sm:$0xff]
      %v697 = vld [vmem:[#allocation6 + $0x50] sm:$0xff]
      %v698 = vld [vmem:[#allocation6 + $0x58] sm:$0xff]
      %v699 = vld [vmem:[#allocation6 + $0x60] sm:$0xff]
      %v700 = vld [vmem:[#allocation6 + $0x68] sm:$0xff]
      %v701 = vld [vmem:[#allocation6 + $0x70] sm:$0xff]
      %v702 = vld [vmem:[#allocation6 + $0x78] sm:$0xff]
      %703 = vxpose.xlu0.b32.start [1/16] %v670, 128
      %704 = vxpose.xlu0.b32.cont [2/16] %v671, 128
      %705 = vxpose.xlu0.b32.cont [3/16] %v672, 128
      %706 = vxpose.xlu0.b32.cont [4/16] %v673, 128
      %707 = vxpose.xlu0.b32.cont [5/16] %v674, 128
      %708 = vxpose.xlu0.b32.cont [6/16] %v675, 128
      %709 = vxpose.xlu0.b32.cont [7/16] %v676, 128
      %710 = vxpose.xlu0.b32.cont [8/16] %v677, 128
      %711 = vxpose.xlu0.b32.cont [9/16] %v678, 128
      %712 = vxpose.xlu0.b32.cont [10/16] %v679, 128
      %713 = vxpose.xlu0.b32.cont [11/16] %v680, 128
      %714 = vxpose.xlu0.b32.cont [12/16] %v681, 128
      %715 = vxpose.xlu0.b32.cont [13/16] %v682, 128
      %716 = vxpose.xlu0.b32.cont [14/16] %v683, 128
      %717 = vxpose.xlu0.b32.cont [15/16] %v684, 128
      %718 = vxpose.xlu0.b32.end [16/16] %v685, 128
      %v719 = vpop.trf.xlu0
      %v720 = vpop.trf.xlu0
      %v721 = vpop.trf.xlu0
      %v722 = vpop.trf.xlu0
      %v723 = vpop.trf.xlu0
      %v724 = vpop.trf.xlu0
      %v725 = vpop.trf.xlu0
      %v726 = vpop.trf.xlu0
      %v727 = vpop.trf.xlu0
      %v728 = vpop.trf.xlu0
      %v729 = vpop.trf.xlu0
      %v730 = vpop.trf.xlu0
      %v731 = vpop.trf.xlu0
      %v732 = vpop.trf.xlu0
      %v733 = vpop.trf.xlu0
      %v734 = vpop.trf.xlu0
      %735 = vmatprep.subr.mxu0 0.0
      %736 = vmatpush1.msra.mxu0 %v687
      %737 = vmatprep.subr.mxu0 0.0
      %738 = vmatpush1.msra.mxu0 %v688
      %739 = vmatprep.subr.mxu0 0.0
      %740 = vmatpush1.msra.mxu0 %v689
      %741 = vmatprep.subr.mxu0 0.0
      %742 = vmatpush1.msra.mxu0 %v690
      %743 = vmatprep.subr.mxu0 0.0
      %744 = vmatpush1.msra.mxu0 %v691
      %745 = vmatprep.subr.mxu0 0.0
      %746 = vmatpush1.msra.mxu0 %v692
      %747 = vmatprep.subr.mxu0 0.0
      %748 = vmatpush1.msra.mxu0 %v693
      %749 = vmatprep.subr.mxu0 0.0
      %750 = vmatpush1.msra.mxu0 %v694
      %751 = vmatprep.subr.mxu0 0.0
      %752 = vmatpush1.msra.mxu0 %v695
      %753 = vmatprep.subr.mxu0 0.0
      %754 = vmatpush1.msra.mxu0 %v696
      %755 = vmatprep.subr.mxu0 0.0
      %756 = vmatpush1.msra.mxu0 %v697
      %757 = vmatprep.subr.mxu0 0.0
      %758 = vmatpush1.msra.mxu0 %v698
      %759 = vmatprep.subr.mxu0 0.0
      %760 = vmatpush1.msra.mxu0 %v699
      %761 = vmatprep.subr.mxu0 0.0
      %762 = vmatpush1.msra.mxu0 %v700
      %763 = vmatprep.subr.mxu0 0.0
      %764 = vmatpush1.msra.mxu0 %v701
      %765 = vmatprep.subr.mxu0 0.0
      %766 = vmatpush1.msra.mxu0 %v702
      %767 = vmatprep.subr.mxu0 0.0
      %768 = vmatpush1.msra.mxu0 0.0
      %769 = vmatprep.subr.mxu0 0.0
      %770 = vmatpush1.msra.mxu0 0.0
      %771 = vmatprep.subr.mxu0 0.0
      %772 = vmatpush1.msra.mxu0 0.0
      %773 = vmatprep.subr.mxu0 0.0
      %774 = vmatpush1.msra.mxu0 0.0
      %775 = vmatprep.subr.mxu0 0.0
      %776 = vmatpush1.msra.mxu0 0.0
      %777 = vmatprep.subr.mxu0 0.0
      %778 = vmatpush1.msra.mxu0 0.0
      %779 = vmatprep.subr.mxu0 0.0
      %780 = vmatpush1.msra.mxu0 0.0
      %781 = vmatprep.subr.mxu0 0.0
      %782 = vmatpush1.msra.mxu0 0.0
      %783 = vmatprep.subr.mxu0 0.0
      %784 = vmatpush1.msra.mxu0 0.0
      %785 = vmatprep.subr.mxu0 0.0
      %786 = vmatpush1.msra.mxu0 0.0
      %787 = vmatprep.subr.mxu0 0.0
      %788 = vmatpush1.msra.mxu0 0.0
      %789 = vmatprep.subr.mxu0 0.0
      %790 = vmatpush1.msra.mxu0 0.0
      %791 = vmatprep.subr.mxu0 0.0
      %792 = vmatpush1.msra.mxu0 0.0
      %793 = vmatprep.subr.mxu0 0.0
      %794 = vmatpush1.msra.mxu0 0.0
      %795 = vmatprep.subr.mxu0 0.0
      %796 = vmatpush1.msra.mxu0 0.0
      %797 = vmatprep.subr.mxu0 0.0
      %798 = vmatpush1.msra.mxu0 0.0
      %799 = vmatprep.mubr.f32.mxu0 0.0
      %800 = vmatmul.mubr.f32.gmra.mrb[0].mxu0 %v719
      %v801 = vpop.f32.mrb[0].mxu0
      %v802 = vadd.f32 0.0, %v801
      %v803 = vpop.f32.mrb[0].mxu0
      %804 = vdwg.mxu0
      %v805 = vadd.f32 %v686, %v802
      %806 = vst [vmem:[#allocation2] sm:$0xff] %v805
    $region37: #{tpu_custom_call.1} parent=1 // pred_fallthru
      _
    // Predicated region
    $region38: #{tpu_custom_call.1} parent=1 // pred_check
      %p807 = pneg %p58
    $region39: #{tpu_custom_call.1} parent=1 // pred_check_branch
      %809 = sbr.rel (%p807) target = $region41
    $region40: #{tpu_custom_call.1} parent=1 // pred_region
      %v810 = vld [vmem:[#allocation2] sm:$0xff]
      %v811 = vmul.f32 %v810, 0.125
      %v812 = vld [vmem:[#allocation8] sm:$0xff]
      %v813 = vld [vmem:[#allocation8 + $0x8] sm:$0xff]
      %v814 = vld [vmem:[#allocation8 + $0x10] sm:$0xff]
      %v815 = vld [vmem:[#allocation8 + $0x18] sm:$0xff]
      %v816 = vld [vmem:[#allocation8 + $0x20] sm:$0xff]
      %v817 = vld [vmem:[#allocation8 + $0x28] sm:$0xff]
      %v818 = vld [vmem:[#allocation8 + $0x30] sm:$0xff]
      %v819 = vld [vmem:[#allocation8 + $0x38] sm:$0xff]
      %v820 = vld [vmem:[#allocation8 + $0x40] sm:$0xff]
      %v821 = vld [vmem:[#allocation8 + $0x48] sm:$0xff]
      %v822 = vld [vmem:[#allocation8 + $0x50] sm:$0xff]
      %v823 = vld [vmem:[#allocation8 + $0x58] sm:$0xff]
      %v824 = vld [vmem:[#allocation8 + $0x60] sm:$0xff]
      %v825 = vld [vmem:[#allocation8 + $0x68] sm:$0xff]
      %v826 = vld [vmem:[#allocation8 + $0x70] sm:$0xff]
      %v827 = vld [vmem:[#allocation8 + $0x78] sm:$0xff]
      %v828 = vld [vmem:[%s3] sm:$0x1]
      %v830 = vlaneseq
      %v831 = vshrl.u32 %v830, 7
      %v832 = vsub.s32 0, %v831
      %v833 = vrot.slane %v828, %v832
      %835 = vmatprep.subr.mxu0 0.0
      %836 = vmatpush1.msra.mxu0 %v812
      %837 = vmatprep.subr.mxu0 0.0
      %838 = vmatpush1.msra.mxu0 %v813
      %839 = vmatprep.subr.mxu0 0.0
      %840 = vmatpush1.msra.mxu0 %v814
      %841 = vmatprep.subr.mxu0 0.0
      %842 = vmatpush1.msra.mxu0 %v815
      %843 = vmatprep.subr.mxu0 0.0
      %844 = vmatpush1.msra.mxu0 %v816
      %845 = vmatprep.subr.mxu0 0.0
      %846 = vmatpush1.msra.mxu0 %v817
      %847 = vmatprep.subr.mxu0 0.0
      %848 = vmatpush1.msra.mxu0 %v818
      %849 = vmatprep.subr.mxu0 0.0
      %850 = vmatpush1.msra.mxu0 %v819
      %851 = vmatprep.subr.mxu0 0.0
      %852 = vmatpush1.msra.mxu0 %v820
      %853 = vmatprep.subr.mxu0 0.0
      %854 = vmatpush1.msra.mxu0 %v821
      %855 = vmatprep.subr.mxu0 0.0
      %856 = vmatpush1.msra.mxu0 %v822
      %857 = vmatprep.subr.mxu0 0.0
      %858 = vmatpush1.msra.mxu0 %v823
      %859 = vmatprep.subr.mxu0 0.0
      %860 = vmatpush1.msra.mxu0 %v824
      %861 = vmatprep.subr.mxu0 0.0
      %862 = vmatpush1.msra.mxu0 %v825
      %863 = vmatprep.subr.mxu0 0.0
      %864 = vmatpush1.msra.mxu0 %v826
      %865 = vmatprep.subr.mxu0 0.0
      %866 = vmatpush1.msra.mxu0 %v827
      %867 = vmatprep.subr.mxu0 0.0
      %868 = vmatpush1.msra.mxu0 0.0
      %869 = vmatprep.subr.mxu0 0.0
      %870 = vmatpush1.msra.mxu0 0.0
      %871 = vmatprep.subr.mxu0 0.0
      %872 = vmatpush1.msra.mxu0 0.0
      %873 = vmatprep.subr.mxu0 0.0
      %874 = vmatpush1.msra.mxu0 0.0
      %875 = vmatprep.subr.mxu0 0.0
      %876 = vmatpush1.msra.mxu0 0.0
      %877 = vmatprep.subr.mxu0 0.0
      %878 = vmatpush1.msra.mxu0 0.0
      %879 = vmatprep.subr.mxu0 0.0
      %880 = vmatpush1.msra.mxu0 0.0
      %881 = vmatprep.subr.mxu0 0.0
      %882 = vmatpush1.msra.mxu0 0.0
      %883 = vmatprep.subr.mxu0 0.0
      %884 = vmatpush1.msra.mxu0 0.0
      %885 = vmatprep.subr.mxu0 0.0
      %886 = vmatpush1.msra.mxu0 0.0
      %887 = vmatprep.subr.mxu0 0.0
      %888 = vmatpush1.msra.mxu0 0.0
      %889 = vmatprep.subr.mxu0 0.0
      %890 = vmatpush1.msra.mxu0 0.0
      %891 = vmatprep.subr.mxu0 0.0
      %892 = vmatpush1.msra.mxu0 0.0
      %893 = vmatprep.subr.mxu0 0.0
      %894 = vmatpush1.msra.mxu0 0.0
      %895 = vmatprep.subr.mxu0 0.0
      %896 = vmatpush1.msra.mxu0 0.0
      %897 = vmatprep.subr.mxu0 0.0
      %898 = vmatpush1.msra.mxu0 0.0
      %899 = vmatprep.mubr.f32.mxu0 0.0
      %900 = vmatmul.mubr.f32.gmra.mrb[0].mxu0 %v811
      %v901 = vpop.f32.mrb[0].mxu0
      %v902 = vadd.f32 %v833, %v901
      %v903 = vpop.f32.mrb[0].mxu0
      %904 = vdwg.mxu0
      %905 = vst [vmem:[#allocation9] sm:$0xff] %v902
    $region41: #{tpu_custom_call.1} parent=1 // pred_fallthru
      _
    // Predicated region
    $region42: #{tpu_custom_call.1} parent=1 // pred_check
      _
    $region43: #{tpu_custom_call.1} parent=1 // pred_check_branch
      %907 = sbr.rel (0) target = $region45
    $region44: #{tpu_custom_call.1} parent=1 // pred_region
      %s909 = ssub.s32 128, 128
      %910 = vsyncadd [#allocation5], %s909
      %s912 = sshll.u32 [#allocation9], 4
      %s913 = int_to_ptr.vmem [resolvable:$true] %s912
      %915 = dma.vmem_to_hbm [thread:$0]  %s913, 128, %s4, [#allocation5]
    $region45: #{tpu_custom_call.1} parent=1 // pred_fallthru
      _
    // Predicated region
    $region46: #{tpu_custom_call.1} parent=1 // pred_check
      _
    $region47: #{tpu_custom_call.1} parent=1 // pred_check_branch
      %917 = sbr.rel (0) target = $region49
    $region48: #{tpu_custom_call.1} parent=1 // pred_region
      %918 = dma.done [#allocation5], 128
    $region49: #{tpu_custom_call.1} parent=1 // pred_fallthru
      _
    %919 = vsyncpa [#allocation4], 1
    %920 = vsyncpa [#allocation7], 1
    %921 = vsyncpa [#allocation5], 1

</llo_original>
